<compile_context>
chip_gen: v5e
topology: v5e:2x2
jax: 0.10.0
libtpu: 0.0.40
codegen_flags: <defaults>
</compile_context>

<pallas_src>
import jax
import jax.numpy as jnp
from jax import lax
from jax.experimental import pallas as pl
from jax.experimental.pallas import tpu as pltpu


def _round_up(v, m):
    return (v + m - 1) // m * m


def _global_sa_kernel(tiles_per_core, compute_dtype):
    """Kernel body: packed per-point MLP + segment-max into the resident accumulator."""

    def kernel(lo_ref, hi_ref,                       # scalar prefetch (SMEM)
               pts_ref, bid_ref,                     # per-point tiles (VMEM)
               w1_ref, w2_ref, b2_ref, w3_ref, b3_ref,   # weights (full, VMEM)
               out_ref):                             # (1, B, Houtp) accumulator
        t = pl.program_id(1)

        # Initialize this core's max-accumulator on its first point-tile.
        @pl.when(t == 0)
        def _():
            out_ref[...] = jnp.full_like(out_ref, -jnp.inf)

        flat = pl.program_id(0) * tiles_per_core + t
        lo = lo_ref[flat]
        hi = hi_ref[flat]

        # Fully padded tiles (lo > hi) skip both the MLP and the scatter.
        @pl.when(hi >= lo)
        def _():
            # ---- shared MLP on this tile (MXU matmuls, f32 accumulation) ----
            # Layer 1: packed input [x | pos | 1] @ [W1x ; W1p ; b1]  (bias folded in).
            p = pts_ref[...].astype(compute_dtype)
            h = jnp.dot(p, w1_ref[...], preferred_element_type=jnp.float32)
            h = jnp.maximum(h, 0.0)
            h = jnp.dot(h.astype(compute_dtype), w2_ref[...],
                        preferred_element_type=jnp.float32) + b2_ref[...]
            h = jnp.maximum(h, 0.0)
            h = jnp.dot(h.astype(compute_dtype), w3_ref[...],
                        preferred_element_type=jnp.float32) + b3_ref[...]
            # plain last layer: no activation (torch_geometric MLP plain_last=True)

            bidx = bid_ref[...]                      # (tile, 1) int32; -1 = pad

            # Fast path: the whole tile belongs to a single batch id (common for
            # batch-sorted points) -> one masked max + one dynamic-row RMW.
            @pl.when(lo == hi)
            def _():
                m = jnp.max(jnp.where(bidx == lo, h, -jnp.inf), axis=0, keepdims=True)
                cur = out_ref[0, pl.ds(lo, 1), :]
                out_ref[0, pl.ds(lo, 1), :] = jnp.maximum(cur, m)

            # Slow path: tile straddles batch boundaries -> visit only [lo, hi].
            @pl.when(lo < hi)
            def _():
                def body(b, carry):
                    m = jnp.max(jnp.where(bidx == b, h, -jnp.inf),
                                axis=0, keepdims=True)
                    cur = out_ref[0, pl.ds(b, 1), :]
                    out_ref[0, pl.ds(b, 1), :] = jnp.maximum(cur, m)
                    return carry

                lax.fori_loop(lo, hi + 1, body, 0)

    return kernel


def global_sa_module(x, pos, batch, params, num_batches, *,
                     tile_n=1024, core_split=None, compute_dtype=jnp.bfloat16):
    """JAX wrapper reproducing GlobalSAModule.forward.

    x:     (N, C)  float
    pos:   (N, 3)  float
    batch: (N,)    int, values in [0, num_batches); points should be batch-sorted.
    params: (w1, b1, w2, b2, w3, b3) with w_i (Cin_i, Cout_i), b_i (1, Cout_i)
    """
    x = jnp.asarray(x, jnp.float32)
    pos = jnp.asarray(pos, jnp.float32)
    batch = jnp.asarray(batch, jnp.int32)
    n, c_feat = x.shape

    # core_split: use both TensorCores on v7x only; on v5e/v6e an extra grid axis
    # is serialized overhead.
    if core_split is None:
        kind = ""
        try:
            kind = jax.devices()[0].device_kind.lower()
        except Exception:
            pass
        core_split = 2 if ("v7" in kind or "tpu7" in kind) else 1

    # ---- weight prep (one-time) ----
    # Fold b1 into W1 as an extra input row (matches the [x | pos | 1] packed input);
    # lane-pad hidden widths and the output width to multiples of 128 with zeros.
    w1, b1, w2, b2, w3, b3 = params
    h1, h2, hout = w1.shape[1], w2.shape[1], w3.shape[1]
    h1p, h2p, houtp = _round_up(h1, 128), _round_up(h2, 128), _round_up(hout, 128)
    cd = compute_dtype
    cpk = c_feat + 3 + 1                                    # packed input width
    w1_packed = jnp.concatenate([jnp.asarray(w1, jnp.float32),
                                 jnp.asarray(b1, jnp.float32).reshape(1, h1)], axis=0)
    w1p = jnp.pad(w1_packed, ((0, 0), (0, h1p - h1))).astype(cd)        # (cpk, h1p)
    w2p = jnp.pad(jnp.asarray(w2, jnp.float32),
                  ((0, h1p - h1), (0, h2p - h2))).astype(cd)
    b2p = jnp.pad(jnp.asarray(b2, jnp.float32), ((0, 0), (0, h2p - h2)))
    w3p = jnp.pad(jnp.asarray(w3, jnp.float32),
                  ((0, h2p - h2), (0, houtp - hout))).astype(cd)
    b3p = jnp.pad(jnp.asarray(b3, jnp.float32), ((0, 0), (0, houtp - hout)))

    # ---- point packing + tiling: one (N, cpk) input, big tiles, tail padded ----
    per_core = -(-n // core_split)
    tile_eff = _round_up(min(tile_n, _round_up(per_core, 8)), 8)
    tpc = -(-per_core // tile_eff)                          # tiles per core
    n_pad = core_split * tpc * tile_eff

    pts = jnp.concatenate([x, pos, jnp.ones((n, 1), jnp.float32)], axis=1)  # (n, cpk)
    if n_pad != n:
        pts = jnp.pad(pts, ((0, n_pad - n), (0, 0)))
        batch = jnp.pad(batch, (0, n_pad - n), constant_values=-1)
    # Guard the dynamic accumulator write: VMEM refs have no runtime bounds check.
    batch = jnp.clip(batch, -1, num_batches - 1)
    batch2d = batch.reshape(n_pad, 1)

    # Per-tile [lo, hi] batch-id range (correct for unsorted batch too; tight if sorted).
    bt = batch.reshape(core_split * tpc, tile_eff)
    valid = bt >= 0
    tile_lo = jnp.min(jnp.where(valid, bt, jnp.iinfo(jnp.int32).max), axis=1).astype(jnp.int32)
    tile_hi = jnp.max(jnp.where(valid, bt, -1), axis=1).astype(jnp.int32)

    pt_idx = lambda ci, ti, lo, hi: (ci * tpc + ti, 0)
    full2d = lambda ci, ti, lo, hi: (0, 0)

    partial = pl.pallas_call(
        _global_sa_kernel(tpc, compute_dtype),
        out_shape=jax.ShapeDtypeStruct((core_split, num_batches, houtp), jnp.float32),
        grid_spec=pltpu.PrefetchScalarGridSpec(
            num_scalar_prefetch=2,
            grid=(core_split, tpc),
            in_specs=[
                pl.BlockSpec((tile_eff, cpk), pt_idx),      # packed [x|pos|1] tile
                pl.BlockSpec((tile_eff, 1), pt_idx),        # batch-id tile
                pl.BlockSpec(w1p.shape, full2d),
                pl.BlockSpec(w2p.shape, full2d),
                pl.BlockSpec(b2p.shape, full2d),
                pl.BlockSpec(w3p.shape, full2d),
                pl.BlockSpec(b3p.shape, full2d),
            ],
            out_specs=pl.BlockSpec((1, num_batches, houtp),
                                   lambda ci, ti, lo, hi: (ci, 0, 0)),
        ),
        compiler_params=pltpu.CompilerParams(
            dimension_semantics=("parallel", "arbitrary")),  # cores x reduction
    )(tile_lo, tile_hi, pts, batch2d, w1p, w2p, b2p, w3p, b3p)

    out = jnp.max(partial, axis=0)[:, :hout]                 # combine cores, unpad lanes
    pos_out = jnp.zeros((num_batches, 3), dtype=pos.dtype)   # pos.new_zeros
    batch_out = jnp.arange(num_batches, dtype=jnp.int32)     # torch.arange
    return out, pos_out, batch_out


def _reference(x, pos, batch, params, num_batches):
    """Pure-JAX f32 reference for verification."""
    w1, b1, w2, b2, w3, b3 = params
    h = jnp.concatenate([x, pos], axis=1)
    h = jnp.maximum(h @ w1 + b1, 0.0)
    h = jnp.maximum(h @ w2 + b2, 0.0)
    h = h @ w3 + b3
    return jnp.stack(
        [jnp.max(jnp.where((batch == b)[:, None], h, -jnp.inf), axis=0)
         for b in range(num_batches)], axis=0)


if __name__ == "__main__":
    key = jax.random.PRNGKey(0)
    k_x, k_pos, k_w1, k_w2, k_w3 = jax.random.split(key, 5)

    # Small shapes consistent with the module: N points, C features, B examples.
    N, C, B = 64, 4, 2
    CIN = C + 3                       # cat([x, pos], dim=1)
    H1, H2, HOUT = 32, 64, 128        # MLP([C+3, 32, 64, 128])

    x = jax.random.normal(k_x, (N, C), dtype=jnp.float32)
    pos = jax.random.normal(k_pos, (N, 3), dtype=jnp.float32)
    batch = jnp.repeat(jnp.arange(B, dtype=jnp.int32), N // B)   # sorted batch ids

    w1 = jax.random.normal(k_w1, (CIN, H1), dtype=jnp.float32) * 0.1
    b1 = jnp.full((1, H1), 0.01, dtype=jnp.float32)
    w2 = jax.random.normal(k_w2, (H1, H2), dtype=jnp.float32) * 0.1
    b2 = jnp.full((1, H2), 0.01, dtype=jnp.float32)
    w3 = jax.random.normal(k_w3, (H2, HOUT), dtype=jnp.float32) * 0.1
    b3 = jnp.full((1, HOUT), 0.01, dtype=jnp.float32)
    params = (w1, b1, w2, b2, w3, b3)

    ref = _reference(x, pos, batch, params, B)

    # Default path: bf16 MXU operands (f32 accumulation / elementwise), packed first
    # layer, auto core_split (2 on v7x, 1 elsewhere), big tiles.
    feat, pos_out, batch_out = global_sa_module(x, pos, batch, params, num_batches=B)
    jax.block_until_ready((feat, pos_out, batch_out))
    assert feat.shape == (B, HOUT)
    assert pos_out.shape == (B, 3)
    assert batch_out.shape == (B,)
    assert jnp.allclose(feat, ref, rtol=2e-2, atol=2e-2)
    assert jnp.all(pos_out == 0)
    assert jnp.array_equal(batch_out, jnp.arange(B, dtype=jnp.int32))

    # f32 path, forced 2-way core split + non-dividing tile: exercises the padded tail
    # (batch id -1), a tile straddling a batch boundary (fori_loop path), the
    # single-batch fast path, and a fully-padded tile (skipped entirely).
    feat_f32, _, _ = global_sa_module(
        x, pos, batch, params, num_batches=B,
        tile_n=24, core_split=2, compute_dtype=jnp.float32)
    jax.block_until_ready(feat_f32)
    assert jnp.allclose(feat_f32, ref, rtol=1e-3, atol=1e-3)

    print("KERNEL_OK")
</pallas_src>

<mosaic_0001>
module attributes {stable_mosaic.version = 11 : i64} {
  func.func @kernel(%arg0: i32, %arg1: i32, %arg2: memref<1xi32, #tpu.memory_space<smem>>, %arg3: memref<1xi32, #tpu.memory_space<smem>>, %arg4: memref<64x8xf32, #tpu.memory_space<vmem>>, %arg5: memref<64x1xi32, #tpu.memory_space<vmem>>, %arg6: memref<8x128xbf16, #tpu.memory_space<vmem>>, %arg7: memref<128x128xbf16, #tpu.memory_space<vmem>>, %arg8: memref<1x128xf32, #tpu.memory_space<vmem>>, %arg9: memref<128x128xbf16, #tpu.memory_space<vmem>>, %arg10: memref<1x128xf32, #tpu.memory_space<vmem>>, %arg11: memref<1x2x128xf32, #tpu.memory_space<vmem>>) attributes {dimension_semantics = [#tpu.dimension_semantics<parallel>, #tpu.dimension_semantics<arbitrary>], iteration_bounds = array<i64: 1, 1>, scalar_prefetch = 2 : i64, scratch_operands = 0 : i64, tpu.core_type = #tpu.core_type<tc>, window_params = [{transform_indices = @transform_0, window_bounds = array<i64: 64, 8>}, {transform_indices = @transform_1, window_bounds = array<i64: 64, 1>}, {pipeline_mode = #tpu.pipeline_mode<synchronous>, transform_indices = @transform_2, window_bounds = array<i64: 8, 128>}, {pipeline_mode = #tpu.pipeline_mode<synchronous>, transform_indices = @transform_3, window_bounds = array<i64: 128, 128>}, {pipeline_mode = #tpu.pipeline_mode<synchronous>, transform_indices = @transform_4, window_bounds = array<i64: 1, 128>}, {pipeline_mode = #tpu.pipeline_mode<synchronous>, transform_indices = @transform_5, window_bounds = array<i64: 128, 128>}, {pipeline_mode = #tpu.pipeline_mode<synchronous>, transform_indices = @transform_6, window_bounds = array<i64: 1, 128>}, {transform_indices = @transform_7, window_bounds = array<i64: 1, 2, 128>}]} {
    %c0_i32 = arith.constant 0 : i32
    %0 = arith.cmpi eq, %arg1, %c0_i32 : i32
    %1 = arith.extui %0 : i1 to i32
    %c0_i32_0 = arith.constant 0 : i32
    %2 = arith.cmpi ne, %1, %c0_i32_0 : i32
    scf.if %2 {
      %cst = arith.constant 0xFF800000 : f32
      %12 = vector.broadcast %cst : f32 to vector<1x2x128xf32>
      %c0 = arith.constant 0 : index
      %c0_2 = arith.constant 0 : index
      %c0_3 = arith.constant 0 : index
      %13 = vector.load %arg11[%c0, %c0_2, %c0_3] : memref<1x2x128xf32, #tpu.memory_space<vmem>>, vector<1x2x128xf32>
      tpu.vector_store %arg11[%c0, %c0_2, %c0_3], %12 {strides = array<i32>} : memref<1x2x128xf32, #tpu.memory_space<vmem>>, vector<1x2x128xf32>,
    } else {
    }
    %c1_i32 = arith.constant 1 : i32
    %3 = arith.muli %arg0, %c1_i32 : i32
    %4 = arith.addi %3, %arg1 : i32
    %5 = arith.index_cast %4 : i32 to index
    %6 = memref.load %arg2[%5] : memref<1xi32, #tpu.memory_space<smem>>
    %7 = arith.index_cast %4 : i32 to index
    %8 = memref.load %arg3[%7] : memref<1xi32, #tpu.memory_space<smem>>
    %9 = arith.cmpi sge, %8, %6 : i32
    %10 = arith.extui %9 : i1 to i32
    %c0_i32_1 = arith.constant 0 : i32
    %11 = arith.cmpi ne, %10, %c0_i32_1 : i32
    scf.if %11 {
      %c0 = arith.constant 0 : index
      %c0_2 = arith.constant 0 : index
      %12 = vector.load %arg4[%c0, %c0_2] : memref<64x8xf32, #tpu.memory_space<vmem>>, vector<64x8xf32>
      %13 = arith.truncf %12 : vector<64x8xf32> to vector<64x8xbf16>
      %c0_3 = arith.constant 0 : index
      %c0_4 = arith.constant 0 : index
      %14 = vector.load %arg6[%c0_3, %c0_4] : memref<8x128xbf16, #tpu.memory_space<vmem>>, vector<8x128xbf16>
      %cst = arith.constant dense<0.000000e+00> : vector<64x128xf32>
      %15 = tpu.matmul %13, %14, %cst {dimension_numbers = #tpu.dot_dimension_numbers<[1], [0], [0], [1], [0, 0, 1, 1], [], []>} : vector<64x8xbf16>, vector<8x128xbf16>, vector<64x128xf32> -> vector<64x128xf32>
      %cst_5 = arith.constant 0.000000e+00 : f32
      %16 = vector.broadcast %cst_5 : f32 to vector<64x128xf32>
      %17 = arith.maximumf %15, %16 : vector<64x128xf32>
      %18 = arith.truncf %17 : vector<64x128xf32> to vector<64x128xbf16>
      %c0_6 = arith.constant 0 : index
      %c0_7 = arith.constant 0 : index
      %19 = vector.load %arg7[%c0_6, %c0_7] : memref<128x128xbf16, #tpu.memory_space<vmem>>, vector<128x128xbf16>
      %cst_8 = arith.constant dense<0.000000e+00> : vector<64x128xf32>
      %20 = tpu.matmul %18, %19, %cst_8 {dimension_numbers = #tpu.dot_dimension_numbers<[1], [0], [0], [1], [0, 0, 1, 1], [], []>} : vector<64x128xbf16>, vector<128x128xbf16>, vector<64x128xf32> -> vector<64x128xf32>
      %c0_9 = arith.constant 0 : index
      %c0_10 = arith.constant 0 : index
      %21 = vector.load %arg8[%c0_9, %c0_10] : memref<1x128xf32, #tpu.memory_space<vmem>>, vector<1x128xf32>
      %22 = vector.broadcast %21 : vector<1x128xf32> to vector<64x128xf32>
      %23 = arith.addf %20, %22 : vector<64x128xf32>
      %cst_11 = arith.constant 0.000000e+00 : f32
      %24 = vector.broadcast %cst_11 : f32 to vector<64x128xf32>
      %25 = arith.maximumf %23, %24 : vector<64x128xf32>
      %26 = arith.truncf %25 : vector<64x128xf32> to vector<64x128xbf16>
      %c0_12 = arith.constant 0 : index
      %c0_13 = arith.constant 0 : index
      %27 = vector.load %arg9[%c0_12, %c0_13] : memref<128x128xbf16, #tpu.memory_space<vmem>>, vector<128x128xbf16>
      %cst_14 = arith.constant dense<0.000000e+00> : vector<64x128xf32>
      %28 = tpu.matmul %26, %27, %cst_14 {dimension_numbers = #tpu.dot_dimension_numbers<[1], [0], [0], [1], [0, 0, 1, 1], [], []>} : vector<64x128xbf16>, vector<128x128xbf16>, vector<64x128xf32> -> vector<64x128xf32>
      %c0_15 = arith.constant 0 : index
      %c0_16 = arith.constant 0 : index
      %29 = vector.load %arg10[%c0_15, %c0_16] : memref<1x128xf32, #tpu.memory_space<vmem>>, vector<1x128xf32>
      %30 = vector.broadcast %29 : vector<1x128xf32> to vector<64x128xf32>
      %31 = arith.addf %28, %30 : vector<64x128xf32>
      %c0_17 = arith.constant 0 : index
      %c0_18 = arith.constant 0 : index
      %32 = vector.load %arg5[%c0_17, %c0_18] : memref<64x1xi32, #tpu.memory_space<vmem>>, vector<64x1xi32>
      %33 = arith.cmpi eq, %6, %8 : i32
      %34 = arith.extui %33 : i1 to i32
      %c0_i32_19 = arith.constant 0 : i32
      %35 = arith.cmpi ne, %34, %c0_i32_19 : i32
      scf.if %35 {
        %39 = vector.broadcast %6 : i32 to vector<64x1xi32>
        %40 = arith.cmpi eq, %32, %39 : vector<64x1xi32>
        %cst_21 = arith.constant 0xFF800000 : f32
        %41 = vector.shape_cast %40 : vector<64x1xi1> to vector<64x1xi1>
        %42 = vector.broadcast %41 : vector<64x1xi1> to vector<64x128xi1>
        %43 = vector.broadcast %cst_21 : f32 to vector<64x128xf32>
        %44 = arith.select %42, %31, %43 : vector<64x128xi1>, vector<64x128xf32>
        %cst_22 = arith.constant dense<0xFF800000> : vector<128xf32>
        %45 = vector.multi_reduction <maximumf>, %44, %cst_22 [0] : vector<64x128xf32> to vector<128xf32>
        %46 = vector.shape_cast %45 : vector<128xf32> to vector<1x128xf32>
        %c0_23 = arith.constant 0 : index
        %47 = arith.index_cast %6 : i32 to index
        %c0_24 = arith.constant 0 : index
        %48 = vector.load %arg11[%c0_23, %47, %c0_24] : memref<1x2x128xf32, #tpu.memory_space<vmem>>, vector<1x1x128xf32>
        %49 = vector.shape_cast %48 : vector<1x1x128xf32> to vector<1x128xf32>
        %50 = arith.maximumf %49, %46 : vector<1x128xf32>
        %c0_25 = arith.constant 0 : index
        %51 = arith.index_cast %6 : i32 to index
        %c0_26 = arith.constant 0 : index
        %52 = vector.load %arg11[%c0_25, %51, %c0_26] : memref<1x2x128xf32, #tpu.memory_space<vmem>>, vector<1x1x128xf32>
        %53 = vector.shape_cast %52 : vector<1x1x128xf32> to vector<1x128xf32>
        %54 = vector.shape_cast %50 : vector<1x128xf32> to vector<1x1x128xf32>
        tpu.vector_store %arg11[%c0_25, %51, %c0_26], %54 {strides = array<i32>} : memref<1x2x128xf32, #tpu.memory_space<vmem>>, vector<1x1x128xf32>,
      } else {
      }
      %36 = arith.cmpi slt, %6, %8 : i32
      %37 = arith.extui %36 : i1 to i32
      %c0_i32_20 = arith.constant 0 : i32
      %38 = arith.cmpi ne, %37, %c0_i32_20 : i32
      scf.if %38 {
        %c1_i32_21 = arith.constant 1 : i32
        %39 = arith.addi %8, %c1_i32_21 : i32
        %c0_i32_22 = arith.constant 0 : i32
        %40 = arith.subi %39, %6 : i32
        %41 = arith.addi %6, %40 : i32
        %c1_i32_23 = arith.constant 1 : i32
        scf.for %arg12 = %6 to %41 step %c1_i32_23  : i32 {
          %42 = vector.broadcast %arg12 : i32 to vector<64x1xi32>
          %43 = arith.cmpi eq, %32, %42 : vector<64x1xi32>
          %cst_24 = arith.constant 0xFF800000 : f32
          %44 = vector.shape_cast %43 : vector<64x1xi1> to vector<64x1xi1>
          %45 = vector.broadcast %44 : vector<64x1xi1> to vector<64x128xi1>
          %46 = vector.broadcast %cst_24 : f32 to vector<64x128xf32>
          %47 = arith.select %45, %31, %46 : vector<64x128xi1>, vector<64x128xf32>
          %cst_25 = arith.constant dense<0xFF800000> : vector<128xf32>
          %48 = vector.multi_reduction <maximumf>, %47, %cst_25 [0] : vector<64x128xf32> to vector<128xf32>
          %49 = vector.shape_cast %48 : vector<128xf32> to vector<1x128xf32>
          %c0_26 = arith.constant 0 : index
          %50 = arith.index_cast %arg12 : i32 to index
          %c0_27 = arith.constant 0 : index
          %51 = vector.load %arg11[%c0_26, %50, %c0_27] : memref<1x2x128xf32, #tpu.memory_space<vmem>>, vector<1x1x128xf32>
          %52 = vector.shape_cast %51 : vector<1x1x128xf32> to vector<1x128xf32>
          %53 = arith.maximumf %52, %49 : vector<1x128xf32>
          %c0_28 = arith.constant 0 : index
          %54 = arith.index_cast %arg12 : i32 to index
          %c0_29 = arith.constant 0 : index
          %55 = vector.load %arg11[%c0_28, %54, %c0_29] : memref<1x2x128xf32, #tpu.memory_space<vmem>>, vector<1x1x128xf32>
          %56 = vector.shape_cast %55 : vector<1x1x128xf32> to vector<1x128xf32>
          %57 = vector.shape_cast %53 : vector<1x128xf32> to vector<1x1x128xf32>
          tpu.vector_store %arg11[%c0_28, %54, %c0_29], %57 {strides = array<i32>} : memref<1x2x128xf32, #tpu.memory_space<vmem>>, vector<1x1x128xf32>,
        }
      } else {
      }
    } else {
    }
    return
  }
  func.func @transform_0(%arg0: i32, %arg1: i32, %arg2: memref<1xi32, #tpu.memory_space<smem>>, %arg3: memref<1xi32, #tpu.memory_space<smem>>) -> (i32, i32) {
    %c1_i32 = arith.constant 1 : i32
    %0 = arith.muli %arg0, %c1_i32 : i32
    %1 = arith.addi %0, %arg1 : i32
    %c0_i32 = arith.constant 0 : i32
    %c0_i32_0 = arith.constant 0 : i32
    return %1, %c0_i32 : i32, i32
  }
  func.func @transform_1(%arg0: i32, %arg1: i32, %arg2: memref<1xi32, #tpu.memory_space<smem>>, %arg3: memref<1xi32, #tpu.memory_space<smem>>) -> (i32, i32) {
    %c1_i32 = arith.constant 1 : i32
    %0 = arith.muli %arg0, %c1_i32 : i32
    %1 = arith.addi %0, %arg1 : i32
    %c0_i32 = arith.constant 0 : i32
    %c0_i32_0 = arith.constant 0 : i32
    return %1, %c0_i32 : i32, i32
  }
  func.func @transform_2(%arg0: i32, %arg1: i32, %arg2: memref<1xi32, #tpu.memory_space<smem>>, %arg3: memref<1xi32, #tpu.memory_space<smem>>) -> (i32, i32) {
    %c0_i32 = arith.constant 0 : i32
    %c0_i32_0 = arith.constant 0 : i32
    %c0_i32_1 = arith.constant 0 : i32
    return %c0_i32, %c0_i32_0 : i32, i32
  }
  func.func @transform_3(%arg0: i32, %arg1: i32, %arg2: memref<1xi32, #tpu.memory_space<smem>>, %arg3: memref<1xi32, #tpu.memory_space<smem>>) -> (i32, i32) {
    %c0_i32 = arith.constant 0 : i32
    %c0_i32_0 = arith.constant 0 : i32
    %c0_i32_1 = arith.constant 0 : i32
    return %c0_i32, %c0_i32_0 : i32, i32
  }
  func.func @transform_4(%arg0: i32, %arg1: i32, %arg2: memref<1xi32, #tpu.memory_space<smem>>, %arg3: memref<1xi32, #tpu.memory_space<smem>>) -> (i32, i32) {
    %c0_i32 = arith.constant 0 : i32
    %c0_i32_0 = arith.constant 0 : i32
    %c0_i32_1 = arith.constant 0 : i32
    return %c0_i32, %c0_i32_0 : i32, i32
  }
  func.func @transform_5(%arg0: i32, %arg1: i32, %arg2: memref<1xi32, #tpu.memory_space<smem>>, %arg3: memref<1xi32, #tpu.memory_space<smem>>) -> (i32, i32) {
    %c0_i32 = arith.constant 0 : i32
    %c0_i32_0 = arith.constant 0 : i32
    %c0_i32_1 = arith.constant 0 : i32
    return %c0_i32, %c0_i32_0 : i32, i32
  }
  func.func @transform_6(%arg0: i32, %arg1: i32, %arg2: memref<1xi32, #tpu.memory_space<smem>>, %arg3: memref<1xi32, #tpu.memory_space<smem>>) -> (i32, i32) {
    %c0_i32 = arith.constant 0 : i32
    %c0_i32_0 = arith.constant 0 : i32
    %c0_i32_1 = arith.constant 0 : i32
    return %c0_i32, %c0_i32_0 : i32, i32
  }
  func.func @transform_7(%arg0: i32, %arg1: i32, %arg2: memref<1xi32, #tpu.memory_space<smem>>, %arg3: memref<1xi32, #tpu.memory_space<smem>>) -> (i32, i32, i32) {
    %c0_i32 = arith.constant 0 : i32
    %c0_i32_0 = arith.constant 0 : i32
    %c0_i32_1 = arith.constant 0 : i32
    return %arg0, %c0_i32, %c0_i32_0 : i32, i32, i32
  }
}

</mosaic_0001>

<llo_original>
// kernel: tpu_custom_call.1
$region0: #{tpu_custom_call.1}
  #allocation0 [shape = 'u32[]', space=smem, size = 0x4, offset = 0x4, fixed_abs, tag = 'smem constant byte address 0x4 - core index']
  #allocation1 [shape = 'u32[72,128]{1,0:T(1,128)}', space=vmem, size = 0x9000, scoped, tag = 'internal scratch']
  #allocation2 [shape = 's32[1]{0}', space=sflag, size = 0x4, scoped, tag = 'scoped memory for tpu_custom_call.1']
  #allocation3 [shape = 's32[1]{0:T(128)S(6)}', space=smem, size = 0x200, scoped, tag = 'prefetched SMEM operand 0']
  #allocation4 [shape = 's32[1]{0:T(128)S(6)}', space=smem, size = 0x200, scoped, tag = 'prefetched SMEM operand 1']
  %s0 = inlined_call_operand.<no memory space> [shape: s32[1], index: 0, kind: input, shape index: {}]
  %s1 = inlined_call_operand.<no memory space> [shape: s32[1], index: 1, kind: input, shape index: {}]
  %s2 = inlined_call_operand.vmem [shape: f32[64,8], index: 2, kind: input, shape index: {}]
  %s3 = inlined_call_operand.vmem [shape: s32[64,1], index: 3, kind: input, shape index: {}]
  %s4 = inlined_call_operand.vmem [shape: bf16[8,128], index: 4, kind: input, shape index: {}]
  %s5 = inlined_call_operand.vmem [shape: bf16[128,128], index: 5, kind: input, shape index: {}]
  %s6 = inlined_call_operand.vmem [shape: f32[1,128], index: 6, kind: input, shape index: {}]
  %s7 = inlined_call_operand.vmem [shape: bf16[128,128], index: 7, kind: input, shape index: {}]
  %s8 = inlined_call_operand.vmem [shape: f32[1,128], index: 8, kind: input, shape index: {}]
  %s9 = inlined_call_operand.hbm [shape: f32[1,2,128], index: 9, kind: output, shape index: {}]
  %s10 = sld [smem:[#allocation0]]
  $region61: #{tpu_custom_call.1} parent=0
    _
  %s12 = ssub.s32 1, %s10
  %s13 = scalar_select 0, %s12, %s10
  %14 = sst [smem:[#allocation3]] %s0
  %15 = sst [smem:[#allocation4]] %s1
  $region1: #{tpu_custom_call.1} parent=0
    #allocation5 [shape = 'u8[1024]{0}', space=vmem, size = 0x400, scoped, tag = 'output window, operand 0, single buffered']
    #allocation6 [shape = 's32[1]{0}', space=sflag, size = 0x4, scoped, tag = 'scoped memory for tpu_custom_call.1']
    %16 = vsyncpa [#allocation6], 0
    // Predicated region
    $region2: #{tpu_custom_call.1} parent=1 // pred_check
      _
    $region3: #{tpu_custom_call.1} parent=1 // pred_check_branch
      %18 = sbr.rel (0) target = $region5
    $region4: #{tpu_custom_call.1} parent=1 // pred_region
      %s19 = sadd.s32 0, 0
      %s20 = smul.u32 8, %s19
      %p21 = scmp.lt.s32.totalorder %s20, 7
      %s22 = scalar_select %p21, %s20, 7
      %s23 = smul.addr %s22, 8
      %s24 = scalar_lea.vmem %s2, %s23
      %s25 = sadd.s32 0, 0
      %s26 = smul.u32 8, %s25
    $region5: #{tpu_custom_call.1} parent=1 // pred_fallthru
      _
    // Predicated region
    $region6: #{tpu_custom_call.1} parent=1 // pred_check
      _
    $region7: #{tpu_custom_call.1} parent=1 // pred_check_branch
      %28 = sbr.rel (0) target = $region9
    $region8: #{tpu_custom_call.1} parent=1 // pred_region
      %s29 = sadd.s32 0, 0
      %s30 = smul.u32 8, %s29
      %p31 = scmp.lt.s32.totalorder %s30, 7
      %s32 = scalar_select %p31, %s30, 7
      %s33 = smul.addr %s32, 8
      %s34 = scalar_lea.vmem %s3, %s33
      %s35 = sadd.s32 0, 0
      %s36 = smul.u32 8, %s35
    $region9: #{tpu_custom_call.1} parent=1 // pred_fallthru
      _
    // Predicated region
    $region10: #{tpu_custom_call.1} parent=1 // pred_check
      _
    $region11: #{tpu_custom_call.1} parent=1 // pred_check_branch
      %38 = sbr.rel (0) target = $region13
    $region12: #{tpu_custom_call.1} parent=1 // pred_region
      _
    $region13: #{tpu_custom_call.1} parent=1 // pred_fallthru
      _
    // Predicated region
    $region14: #{tpu_custom_call.1} parent=1 // pred_check
      _
    $region15: #{tpu_custom_call.1} parent=1 // pred_check_branch
      %40 = sbr.rel (0) target = $region17
    $region16: #{tpu_custom_call.1} parent=1 // pred_region
      _
    $region17: #{tpu_custom_call.1} parent=1 // pred_fallthru
      _
    // Predicated region
    $region18: #{tpu_custom_call.1} parent=1 // pred_check
      _
    $region19: #{tpu_custom_call.1} parent=1 // pred_check_branch
      %42 = sbr.rel (0) target = $region21
    $region20: #{tpu_custom_call.1} parent=1 // pred_region
      _
    $region21: #{tpu_custom_call.1} parent=1 // pred_fallthru
      _
    // Predicated region
    $region22: #{tpu_custom_call.1} parent=1 // pred_check
      _
    $region23: #{tpu_custom_call.1} parent=1 // pred_check_branch
      %44 = sbr.rel (0) target = $region25
    $region24: #{tpu_custom_call.1} parent=1 // pred_region
      _
    $region25: #{tpu_custom_call.1} parent=1 // pred_fallthru
      _
    // Predicated region
    $region26: #{tpu_custom_call.1} parent=1 // pred_check
      _
    $region27: #{tpu_custom_call.1} parent=1 // pred_check_branch
      %46 = sbr.rel (0) target = $region29
    $region28: #{tpu_custom_call.1} parent=1 // pred_region
      _
    $region29: #{tpu_custom_call.1} parent=1 // pred_fallthru
      _
    %s47 = sadd.s32 0, 0
    %s48 = smul.u32 8, %s47
    %p49 = scmp.lt.s32.totalorder %s48, 7
    %s50 = scalar_select %p49, %s48, 7
    %s51 = smul.addr %s50, 8
    %s52 = scalar_lea.vmem %s2, %s51
    %s53 = sadd.s32 0, 0
    %s54 = smul.u32 8, %s53
    %p55 = scmp.lt.s32.totalorder %s54, 7
    %s56 = scalar_select %p55, %s54, 7
    %s57 = smul.addr %s56, 8
    %s58 = scalar_lea.vmem %s3, %s57
    %s59 = sadd.s32 0, 0
    %s60 = smul.u32 8, %s59
    %p61 = scmp.lt.s32.totalorder %s60, 7
    %s62 = scalar_select %p61, %s60, 7
    %s63 = smul.addr %s62, 8
    %s64 = scalar_lea.vmem %s2, %s63
    %s65 = sadd.s32 0, 0
    %s66 = smul.u32 8, %s65
    %s67 = sadd.s32 0, 0
    %s68 = smul.u32 8, %s67
    %p69 = scmp.lt.s32.totalorder %s68, 7
    %s70 = scalar_select %p69, %s68, 7
    %s71 = smul.addr %s70, 8
    %s72 = scalar_lea.vmem %s3, %s71
    %s73 = sadd.s32 0, 0
    %s74 = smul.u32 8, %s73
    %p76 = scmp.eq.s32.totalorder 0, 0
    // Predicated region
    $region30: #{tpu_custom_call.1} parent=1 // pred_check
      %p77 = pneg %p76
    $region31: #{tpu_custom_call.1} parent=1 // pred_check_branch
      %79 = sbr.rel (%p77) target = $region33
    $region32: #{tpu_custom_call.1} parent=1 // pred_region
      %80 = vst [vmem:[#allocation5] sm:$0x3] -inf
    $region33: #{tpu_custom_call.1} parent=1 // pred_fallthru
      _
    %s81 = sadd.s32 0, 0
    %s82 = sld [smem:[#allocation3 + %s81]]
    %s83 = sld [smem:[#allocation4 + %s81]]
    %p84 = scmp.ge.s32.totalorder %s83, %s82
    // Predicated region
    $region34: #{tpu_custom_call.1} parent=1 // pred_check
      %p85 = pneg %p84
    $region35: #{tpu_custom_call.1} parent=1 // pred_check_branch
      %87 = sbr.rel (%p85) target = $region37
    $region36: #{tpu_custom_call.1} parent=1 // pred_region
      %v88 = vld [vmem:[%s64] sm:$0xff]
      %v89 = vld [vmem:[%s64 + $0x8] sm:$0xff]
      %v90 = vld [vmem:[%s64 + $0x10] sm:$0xff]
      %v91 = vld [vmem:[%s64 + $0x18] sm:$0xff]
      %v92 = vld [vmem:[%s64 + $0x20] sm:$0xff]
      %v93 = vld [vmem:[%s64 + $0x28] sm:$0xff]
      %v94 = vld [vmem:[%s64 + $0x30] sm:$0xff]
      %v95 = vld [vmem:[%s64 + $0x38] sm:$0xff]
      %v96 = vpack.c.bf16 %v89, %v88
      %v97 = vpack.c.bf16 %v91, %v90
      %v98 = vpack.c.bf16 %v93, %v92
      %v99 = vpack.c.bf16 %v95, %v94
      %v100 = vld [vmem:[%s4] sm:$0xf]
      %vm101 = vcmask 64512
      %v103 = vsel %vm101, %v96, 0
      %v106 = vsel %vm101, %v97, 0
      %v109 = vsel %vm101, %v98, 0
      %v112 = vsel %vm101, %v99, 0
      %vm114 = vcmask 1043456
      %v116 = vsel %vm114, %v100, 0
      %118 = vmatpush.bf16.msra.mxu0 0
      %119 = vmatpush.bf16.msra.mxu0 0
      %120 = vmatpush.bf16.msra.mxu0 0
      %121 = vmatpush.bf16.msra.mxu0 0
      %122 = vmatpush.bf16.msra.mxu0 0
      %123 = vmatpush.bf16.msra.mxu0 0
      %124 = vmatpush.bf16.msra.mxu0 0
      %125 = vmatpush.bf16.msra.mxu0 %v116
      %126 = vmatmul.bf16.gmra.mxu0 %v103
      %v127 = vpop.f32.mrf.mxu0
      %v128 = vadd.f32 0.0, %v127
      %v129 = vpop.f32.mrf.mxu0
      %v130 = vadd.f32 0.0, %v129
      %131 = vmatmul.bf16.gmra.mxu0 %v106
      %v132 = vpop.f32.mrf.mxu0
      %v133 = vadd.f32 0.0, %v132
      %v134 = vpop.f32.mrf.mxu0
      %v135 = vadd.f32 0.0, %v134
      %136 = vmatmul.bf16.gmra.mxu0 %v109
      %v137 = vpop.f32.mrf.mxu0
      %v138 = vadd.f32 0.0, %v137
      %v139 = vpop.f32.mrf.mxu0
      %v140 = vadd.f32 0.0, %v139
      %141 = vmatmul.bf16.gmra.mxu0 %v112
      %v142 = vpop.f32.mrf.mxu0
      %v143 = vadd.f32 0.0, %v142
      %v144 = vpop.f32.mrf.mxu0
      %v145 = vadd.f32 0.0, %v144
      %146 = vdwg.mxu0
      %v147 = vmax.f32 %v128, 0.0
      %v148 = vmax.f32 %v130, 0.0
      %v149 = vmax.f32 %v133, 0.0
      %v150 = vmax.f32 %v135, 0.0
      %v151 = vmax.f32 %v138, 0.0
      %v152 = vmax.f32 %v140, 0.0
      %v153 = vmax.f32 %v143, 0.0
      %v154 = vmax.f32 %v145, 0.0
      %v155 = vpack.c.bf16 %v148, %v147
      %v156 = vpack.c.bf16 %v150, %v149
      %v157 = vpack.c.bf16 %v152, %v151
      %v158 = vpack.c.bf16 %v154, %v153
      %v159 = vld [vmem:[%s5] sm:$0xf]
      %v160 = vld [vmem:[%s5 + $0x4] sm:$0xf]
      %v161 = vld [vmem:[%s5 + $0x8] sm:$0xf]
      %v162 = vld [vmem:[%s5 + $0xc] sm:$0xf]
      %v163 = vld [vmem:[%s5 + $0x10] sm:$0xf]
      %v164 = vld [vmem:[%s5 + $0x14] sm:$0xf]
      %v165 = vld [vmem:[%s5 + $0x18] sm:$0xf]
      %v166 = vld [vmem:[%s5 + $0x1c] sm:$0xf]
      %v167 = vld [vmem:[%s5 + $0x20] sm:$0xf]
      %v168 = vld [vmem:[%s5 + $0x24] sm:$0xf]
      %v169 = vld [vmem:[%s5 + $0x28] sm:$0xf]
      %v170 = vld [vmem:[%s5 + $0x2c] sm:$0xf]
      %v171 = vld [vmem:[%s5 + $0x30] sm:$0xf]
      %v172 = vld [vmem:[%s5 + $0x34] sm:$0xf]
      %v173 = vld [vmem:[%s5 + $0x38] sm:$0xf]
      %v174 = vld [vmem:[%s5 + $0x3c] sm:$0xf]
      %v175 = vld [vmem:[%s6] sm:$0x1]
      %v177 = vperm.slane %v175, 0
      %v195 = vunpack.c.l.b16 %v159
      %v196 = vunpack.c.l.b16 %v160
      %v197 = vunpack.c.l.b16 %v161
      %v198 = vunpack.c.l.b16 %v162
      %v199 = vunpack.c.l.b16 %v163
      %v200 = vunpack.c.l.b16 %v164
      %v201 = vunpack.c.l.b16 %v165
      %v202 = vunpack.c.l.b16 %v166
      %v203 = vunpack.c.l.b16 %v167
      %v204 = vunpack.c.l.b16 %v168
      %v205 = vunpack.c.l.b16 %v169
      %v206 = vunpack.c.l.b16 %v170
      %v207 = vunpack.c.l.b16 %v171
      %v208 = vunpack.c.l.b16 %v172
      %v209 = vunpack.c.l.b16 %v173
      %v210 = vunpack.c.l.b16 %v174
      %v211 = vpack.c.b16 %v196, %v195
      %v212 = vpack.c.b16 %v198, %v197
      %v213 = vpack.c.b16 %v200, %v199
      %v214 = vpack.c.b16 %v202, %v201
      %v215 = vpack.c.b16 %v204, %v203
      %v216 = vpack.c.b16 %v206, %v205
      %v217 = vpack.c.b16 %v208, %v207
      %v218 = vpack.c.b16 %v210, %v209
      %227 = vmatpush.bf16.msra.mxu0 %v218
      %228 = vmatpush.bf16.msra.mxu0 %v217
      %229 = vmatpush.bf16.msra.mxu0 %v216
      %230 = vmatpush.bf16.msra.mxu0 %v215
      %231 = vmatpush.bf16.msra.mxu0 %v214
      %232 = vmatpush.bf16.msra.mxu0 %v213
      %233 = vmatpush.bf16.msra.mxu0 %v212
      %234 = vmatpush.bf16.msra.mxu0 %v211
      %235 = vmatmul.bf16.gmra.mxu0 %v155
      %v236 = vpop.f32.mrf.mxu0
      %v237 = vadd.f32 %v177, %v236
      %v238 = vpop.f32.mrf.mxu0
      %v239 = vadd.f32 %v177, %v238
      %240 = vmatmul.bf16.gmra.mxu0 %v156
      %v241 = vpop.f32.mrf.mxu0
      %v242 = vadd.f32 %v177, %v241
      %v243 = vpop.f32.mrf.mxu0
      %v244 = vadd.f32 %v177, %v243
      %245 = vmatmul.bf16.gmra.mxu0 %v157
      %v246 = vpop.f32.mrf.mxu0
      %v247 = vadd.f32 %v177, %v246
      %v248 = vpop.f32.mrf.mxu0
      %v249 = vadd.f32 %v177, %v248
      %250 = vmatmul.bf16.gmra.mxu0 %v158
      %v251 = vpop.f32.mrf.mxu0
      %v252 = vadd.f32 %v177, %v251
      %v253 = vpop.f32.mrf.mxu0
      %v254 = vadd.f32 %v177, %v253
      %255 = vdwg.mxu0
      %v256 = vmax.f32 %v237, 0.0
      %v257 = vmax.f32 %v239, 0.0
      %v258 = vmax.f32 %v242, 0.0
      %v259 = vmax.f32 %v244, 0.0
      %v260 = vmax.f32 %v247, 0.0
      %v261 = vmax.f32 %v249, 0.0
      %v262 = vmax.f32 %v252, 0.0
      %v263 = vmax.f32 %v254, 0.0
      %v264 = vpack.c.bf16 %v257, %v256
      %v265 = vpack.c.bf16 %v259, %v258
      %v266 = vpack.c.bf16 %v261, %v260
      %v267 = vpack.c.bf16 %v263, %v262
      %v268 = vld [vmem:[%s7] sm:$0xf]
      %v269 = vld [vmem:[%s7 + $0x4] sm:$0xf]
      %v270 = vld [vmem:[%s7 + $0x8] sm:$0xf]
      %v271 = vld [vmem:[%s7 + $0xc] sm:$0xf]
      %v272 = vld [vmem:[%s7 + $0x10] sm:$0xf]
      %v273 = vld [vmem:[%s7 + $0x14] sm:$0xf]
      %v274 = vld [vmem:[%s7 + $0x18] sm:$0xf]
      %v275 = vld [vmem:[%s7 + $0x1c] sm:$0xf]
      %v276 = vld [vmem:[%s7 + $0x20] sm:$0xf]
      %v277 = vld [vmem:[%s7 + $0x24] sm:$0xf]
      %v278 = vld [vmem:[%s7 + $0x28] sm:$0xf]
      %v279 = vld [vmem:[%s7 + $0x2c] sm:$0xf]
      %v280 = vld [vmem:[%s7 + $0x30] sm:$0xf]
      %v281 = vld [vmem:[%s7 + $0x34] sm:$0xf]
      %v282 = vld [vmem:[%s7 + $0x38] sm:$0xf]
      %v283 = vld [vmem:[%s7 + $0x3c] sm:$0xf]
      %v284 = vld [vmem:[%s8] sm:$0x1]
      %v286 = vperm.slane %v284, 0
      %v304 = vunpack.c.l.b16 %v268
      %v305 = vunpack.c.l.b16 %v269
      %v306 = vunpack.c.l.b16 %v270
      %v307 = vunpack.c.l.b16 %v271
      %v308 = vunpack.c.l.b16 %v272
      %v309 = vunpack.c.l.b16 %v273
      %v310 = vunpack.c.l.b16 %v274
      %v311 = vunpack.c.l.b16 %v275
      %v312 = vunpack.c.l.b16 %v276
      %v313 = vunpack.c.l.b16 %v277
      %v314 = vunpack.c.l.b16 %v278
      %v315 = vunpack.c.l.b16 %v279
      %v316 = vunpack.c.l.b16 %v280
      %v317 = vunpack.c.l.b16 %v281
      %v318 = vunpack.c.l.b16 %v282
      %v319 = vunpack.c.l.b16 %v283
      %v320 = vpack.c.b16 %v305, %v304
      %v321 = vpack.c.b16 %v307, %v306
      %v322 = vpack.c.b16 %v309, %v308
      %v323 = vpack.c.b16 %v311, %v310
      %v324 = vpack.c.b16 %v313, %v312
      %v325 = vpack.c.b16 %v315, %v314
      %v326 = vpack.c.b16 %v317, %v316
      %v327 = vpack.c.b16 %v319, %v318
      %336 = vmatpush.bf16.msra.mxu0 %v327
      %337 = vmatpush.bf16.msra.mxu0 %v326
      %338 = vmatpush.bf16.msra.mxu0 %v325
      %339 = vmatpush.bf16.msra.mxu0 %v324
      %340 = vmatpush.bf16.msra.mxu0 %v323
      %341 = vmatpush.bf16.msra.mxu0 %v322
      %342 = vmatpush.bf16.msra.mxu0 %v321
      %343 = vmatpush.bf16.msra.mxu0 %v320
      %344 = vmatmul.bf16.gmra.mxu0 %v264
      %v345 = vpop.f32.mrf.mxu0
      %v346 = vadd.f32 %v286, %v345
      %v347 = vpop.f32.mrf.mxu0
      %v348 = vadd.f32 %v286, %v347
      %349 = vmatmul.bf16.gmra.mxu0 %v265
      %v350 = vpop.f32.mrf.mxu0
      %v351 = vadd.f32 %v286, %v350
      %v352 = vpop.f32.mrf.mxu0
      %v353 = vadd.f32 %v286, %v352
      %354 = vmatmul.bf16.gmra.mxu0 %v266
      %v355 = vpop.f32.mrf.mxu0
      %v356 = vadd.f32 %v286, %v355
      %v357 = vpop.f32.mrf.mxu0
      %v358 = vadd.f32 %v286, %v357
      %359 = vmatmul.bf16.gmra.mxu0 %v267
      %v360 = vpop.f32.mrf.mxu0
      %v361 = vadd.f32 %v286, %v360
      %v362 = vpop.f32.mrf.mxu0
      %v363 = vadd.f32 %v286, %v362
      %364 = vdwg.mxu0
      %v365 = vld [vmem:[%s72] sm:$0xff]
      %v366 = vld [vmem:[%s72 + $0x8] sm:$0xff]
      %v367 = vld [vmem:[%s72 + $0x10] sm:$0xff]
      %v368 = vld [vmem:[%s72 + $0x18] sm:$0xff]
      %v369 = vld [vmem:[%s72 + $0x20] sm:$0xff]
      %v370 = vld [vmem:[%s72 + $0x28] sm:$0xff]
      %v371 = vld [vmem:[%s72 + $0x30] sm:$0xff]
      %v372 = vld [vmem:[%s72 + $0x38] sm:$0xff]
      %p373 = scmp.eq.s32.totalorder %s82, %s83
      // Predicated region
      $region38: #{tpu_custom_call.1} parent=36 // pred_check
        %p374 = pneg %p373
      $region39: #{tpu_custom_call.1} parent=36 // pred_check_branch
        %376 = sbr.rel (%p374) target = $region41
      $region40: #{tpu_custom_call.1} parent=36 // pred_region
        %v377 = vstv %s82
        %vm378 = vcmp.eq.s32.totalorder %v365, %v377
        %vm379 = vcmp.eq.s32.totalorder %v366, %v377
        %vm380 = vcmp.eq.s32.totalorder %v367, %v377
        %vm381 = vcmp.eq.s32.totalorder %v368, %v377
        %vm382 = vcmp.eq.s32.totalorder %v369, %v377
        %vm383 = vcmp.eq.s32.totalorder %v370, %v377
        %vm384 = vcmp.eq.s32.totalorder %v371, %v377
        %vm385 = vcmp.eq.s32.totalorder %v372, %v377
        %v386 = vsel %vm378, 1, 0
        %v387 = vsel %vm379, 1, 0
        %v388 = vsel %vm380, 1, 0
        %v389 = vsel %vm381, 1, 0
        %v390 = vsel %vm382, 1, 0
        %v391 = vsel %vm383, 1, 0
        %v392 = vsel %vm384, 1, 0
        %v393 = vsel %vm385, 1, 0
        %394 = vset.pattern.permute.xlu0 0
        %395 = vperm.xlu0 %394, %v386
        %v396 = vpop.permute.xlu0 %395
        %397 = vset.pattern.permute.xlu0 0
        %398 = vperm.xlu0 %397, %v387
        %v399 = vpop.permute.xlu0 %398
        %400 = vset.pattern.permute.xlu0 0
        %401 = vperm.xlu0 %400, %v388
        %v402 = vpop.permute.xlu0 %401
        %403 = vset.pattern.permute.xlu0 0
        %404 = vperm.xlu0 %403, %v389
        %v405 = vpop.permute.xlu0 %404
        %406 = vset.pattern.permute.xlu0 0
        %407 = vperm.xlu0 %406, %v390
        %v408 = vpop.permute.xlu0 %407
        %409 = vset.pattern.permute.xlu0 0
        %410 = vperm.xlu0 %409, %v391
        %v411 = vpop.permute.xlu0 %410
        %412 = vset.pattern.permute.xlu0 0
        %413 = vperm.xlu0 %412, %v392
        %v414 = vpop.permute.xlu0 %413
        %415 = vset.pattern.permute.xlu0 0
        %416 = vperm.xlu0 %415, %v393
        %v417 = vpop.permute.xlu0 %416
        %vm418 = vcmp.eq.s32.totalorder %v396, 1
        %vm419 = vcmp.eq.s32.totalorder %v399, 1
        %vm420 = vcmp.eq.s32.totalorder %v402, 1
        %vm421 = vcmp.eq.s32.totalorder %v405, 1
        %vm422 = vcmp.eq.s32.totalorder %v408, 1
        %vm423 = vcmp.eq.s32.totalorder %v411, 1
        %vm424 = vcmp.eq.s32.totalorder %v414, 1
        %vm425 = vcmp.eq.s32.totalorder %v417, 1
        %v426 = vsel %vm418, %v346, -inf
        %v427 = vsel %vm419, %v348, -inf
        %v428 = vsel %vm420, %v351, -inf
        %v429 = vsel %vm421, %v353, -inf
        %v430 = vsel %vm422, %v356, -inf
        %v431 = vsel %vm423, %v358, -inf
        %v432 = vsel %vm424, %v361, -inf
        %v433 = vsel %vm425, %v363, -inf
        %v434 = vmax.f32 %v426, %v430
        %v435 = vmax.f32 %v427, %v431
        %v436 = vmax.f32 %v428, %v432
        %v437 = vmax.f32 %v429, %v433
        %v438 = vmax.f32 %v434, %v435
        %v439 = vmax.f32 %v436, %v437
        %v440 = vmax.f32 %v438, %v439
        %v441 = vrot.slane %v440, 4
        %v442 = vmax.f32 %v440, %v441
        %v443 = vrot.slane %v442, 2
        %v444 = vmax.f32 %v442, %v443
        %v445 = vrot.slane %v444, 1
        %v446 = vmax.f32 %v444, %v445
        %s447 = scalar_lea.vmem [#allocation5], %s82
        %v448 = vld [vmem:[%s447] sm:$0x1]
        %v449 = vmax.f32 %v448, %v446
        %450 = vst [vmem:[%s447] sm:$0x1] %v449
      $region41: #{tpu_custom_call.1} parent=36 // pred_fallthru
        _
      %p451 = scmp.lt.s32.totalorder %s82, %s83
      // Predicated region
      $region42: #{tpu_custom_call.1} parent=36 // pred_check
        %p452 = pneg %p451
      $region43: #{tpu_custom_call.1} parent=36 // pred_check_branch
        %454 = sbr.rel (%p452) target = $region45
      $region44: #{tpu_custom_call.1} parent=36 // pred_region
        %s455 = sadd.s32 %s83, 1
        // While loop
        $region46: #{tpu_custom_call.1} parent=44 // loop_pre_header
          _
        $region47: #{tpu_custom_call.1} parent=44 // loop_header
          %s457 = sphi %s82, %s459
          %p458 = scmp.ge.s32.totalorder %s457, %s455
        $region48: #{tpu_custom_call.1} parent=44 // loop_header_branch
          %461 = sbr.rel (%p458) target = $region52
        $region49: #{tpu_custom_call.1} parent=44 // loop_body
          %v462 = vstv %s457
          %vm463 = vcmp.eq.s32.totalorder %v365, %v462
          %vm464 = vcmp.eq.s32.totalorder %v366, %v462
          %vm465 = vcmp.eq.s32.totalorder %v367, %v462
          %vm466 = vcmp.eq.s32.totalorder %v368, %v462
          %vm467 = vcmp.eq.s32.totalorder %v369, %v462
          %vm468 = vcmp.eq.s32.totalorder %v370, %v462
          %vm469 = vcmp.eq.s32.totalorder %v371, %v462
          %vm470 = vcmp.eq.s32.totalorder %v372, %v462
          %v471 = vsel %vm463, 1, 0
          %v472 = vsel %vm464, 1, 0
          %v473 = vsel %vm465, 1, 0
          %v474 = vsel %vm466, 1, 0
          %v475 = vsel %vm467, 1, 0
          %v476 = vsel %vm468, 1, 0
          %v477 = vsel %vm469, 1, 0
          %v478 = vsel %vm470, 1, 0
          %479 = vset.pattern.permute.xlu0 0
          %480 = vperm.xlu0 %479, %v471
          %v481 = vpop.permute.xlu0 %480
          %482 = vset.pattern.permute.xlu0 0
          %483 = vperm.xlu0 %482, %v472
          %v484 = vpop.permute.xlu0 %483
          %485 = vset.pattern.permute.xlu0 0
          %486 = vperm.xlu0 %485, %v473
          %v487 = vpop.permute.xlu0 %486
          %488 = vset.pattern.permute.xlu0 0
          %489 = vperm.xlu0 %488, %v474
          %v490 = vpop.permute.xlu0 %489
          %491 = vset.pattern.permute.xlu0 0
          %492 = vperm.xlu0 %491, %v475
          %v493 = vpop.permute.xlu0 %492
          %494 = vset.pattern.permute.xlu0 0
          %495 = vperm.xlu0 %494, %v476
          %v496 = vpop.permute.xlu0 %495
          %497 = vset.pattern.permute.xlu0 0
          %498 = vperm.xlu0 %497, %v477
          %v499 = vpop.permute.xlu0 %498
          %500 = vset.pattern.permute.xlu0 0
          %501 = vperm.xlu0 %500, %v478
          %v502 = vpop.permute.xlu0 %501
          %vm503 = vcmp.eq.s32.totalorder %v481, 1
          %vm504 = vcmp.eq.s32.totalorder %v484, 1
          %vm505 = vcmp.eq.s32.totalorder %v487, 1
          %vm506 = vcmp.eq.s32.totalorder %v490, 1
          %vm507 = vcmp.eq.s32.totalorder %v493, 1
          %vm508 = vcmp.eq.s32.totalorder %v496, 1
          %vm509 = vcmp.eq.s32.totalorder %v499, 1
          %vm510 = vcmp.eq.s32.totalorder %v502, 1
          %v511 = vsel %vm503, %v346, -inf
          %v512 = vsel %vm504, %v348, -inf
          %v513 = vsel %vm505, %v351, -inf
          %v514 = vsel %vm506, %v353, -inf
          %v515 = vsel %vm507, %v356, -inf
          %v516 = vsel %vm508, %v358, -inf
          %v517 = vsel %vm509, %v361, -inf
          %v518 = vsel %vm510, %v363, -inf
          %v519 = vmax.f32 %v511, %v515
          %v520 = vmax.f32 %v512, %v516
          %v521 = vmax.f32 %v513, %v517
          %v522 = vmax.f32 %v514, %v518
          %v523 = vmax.f32 %v519, %v520
          %v524 = vmax.f32 %v521, %v522
          %v525 = vmax.f32 %v523, %v524
          %v526 = vrot.slane %v525, 4
          %v527 = vmax.f32 %v525, %v526
          %v528 = vrot.slane %v527, 2
          %v529 = vmax.f32 %v527, %v528
          %v530 = vrot.slane %v529, 1
          %v531 = vmax.f32 %v529, %v530
          %s532 = scalar_lea.vmem [#allocation5], %s457
          %v533 = vld [vmem:[%s532] sm:$0x1]
          %v534 = vmax.f32 %v533, %v531
          %535 = vst [vmem:[%s532] sm:$0x1] %v534
        $region50: #{tpu_custom_call.1} parent=44 // loop_footer
          %s459 = sadd.s32 %s457, 1
        $region51: #{tpu_custom_call.1} parent=44 // loop_footer_branch
          %456 = sbr.rel target = $region47
        $region52: #{tpu_custom_call.1} parent=44 // loop_exit
          _
      $region45: #{tpu_custom_call.1} parent=36 // pred_fallthru
        _
    $region37: #{tpu_custom_call.1} parent=1 // pred_fallthru
      _
    // Predicated region
    $region53: #{tpu_custom_call.1} parent=1 // pred_check
      _
    $region54: #{tpu_custom_call.1} parent=1 // pred_check_branch
      %537 = sbr.rel (0) target = $region56
    $region55: #{tpu_custom_call.1} parent=1 // pred_region
      %539 = vsyncadd [#allocation6], 0
      %s541 = sshll.u32 [#allocation5], 4
      %s542 = int_to_ptr.vmem [resolvable:$true] %s541
      %s543 = sshll.u32 %s9, 4
      %s544 = int_to_ptr.hbm [resolvable:$true] %s543
      %546 = dma.vmem_to_hbm [thread:$0]  %s542, 32, %s544, [#allocation6]
    $region56: #{tpu_custom_call.1} parent=1 // pred_fallthru
      _
    // Predicated region
    $region57: #{tpu_custom_call.1} parent=1 // pred_check
      _
    $region58: #{tpu_custom_call.1} parent=1 // pred_check_branch
      %548 = sbr.rel (0) target = $region60
    $region59: #{tpu_custom_call.1} parent=1 // pred_region
      %550 = dma.done [#allocation6], 32
    $region60: #{tpu_custom_call.1} parent=1 // pred_fallthru
      _
    %551 = vsyncpa [#allocation6], 1

</llo_original>
